<compile_context>
chip_gen: v5e
topology: v5e:2x2
jax: 0.10.0
libtpu: 0.0.40
codegen_flags: <defaults>
</compile_context>

<pallas_src>
import jax
import jax.numpy as jnp
from jax import lax
from jax.experimental import pallas as pl
from jax.experimental.pallas import tpu as pltpu


def _cdiv(a, b):
    return -(-a // b)


# -----------------------------------------------------------------------------
# Fused kernel factory.
# Ref order: targets, outputs, embedding_outputs, *gates,
#            ce_out, *gate_outs, ce_acc (VMEM (tile_n,1)), *gate_accs (VMEM (8|1, G)).
# -----------------------------------------------------------------------------
def _make_fused_kernel(n_gates, n_total, tile_n, tiles_per_split, mu,
                       need_mask, gate_vreg_accum):
    mu_f = float(mu)

    def kernel(*refs):
        tgt_ref = refs[0]
        out_lg_ref = refs[1]
        emb_lg_ref = refs[2]
        gate_refs = refs[3:3 + n_gates]
        ce_out_ref = refs[3 + n_gates]
        gate_out_refs = refs[4 + n_gates:4 + 2 * n_gates]
        ce_acc = refs[4 + 2 * n_gates]
        gate_accs = refs[5 + 2 * n_gates:]

        s = pl.program_id(0)          # batch-split index (parallel across TCs)
        j = pl.program_id(1)          # row-tile index within this split (reduction)
        n_j = pl.num_programs(1)

        # ---- init per-core accumulators at the start of each split ----------
        @pl.when(j == 0)
        def _init():
            ce_acc[...] = jnp.zeros_like(ce_acc)
            for ga in gate_accs:
                ga[...] = jnp.zeros_like(ga)

        tn = out_lg_ref.shape[0]
        tgt = tgt_ref[...]                                  # (tn, 1) int32

        # Validity mask only exists when the tiling is ragged / block-padded.
        if need_mask:
            gblk = s * tiles_per_split + j                  # assigned global block
            row0 = gblk * tile_n
            row_ids = lax.broadcasted_iota(jnp.int32, (tn, 1), 0) + row0
            valid = row_ids < n_total                       # (tn, 1) bool
        else:
            valid = None

        # ---- cross-entropy per-row losses (shared one-hot machinery) --------
        c_out = out_lg_ref.shape[1]
        c_emb = emb_lg_ref.shape[1]

        def make_onehot(c):
            col = lax.broadcasted_iota(jnp.int32, (tn, c), 1)
            return col == tgt                               # (tn, c) bool

        onehot_out = make_onehot(c_out)
        onehot_emb = onehot_out if c_emb == c_out else make_onehot(c_emb)

        def ce_rows(logits_ref, onehot):
            x = logits_ref[...].astype(jnp.float32)         # cast in-kernel
            m = jnp.max(x, axis=-1, keepdims=True)
            lse = jnp.log(jnp.sum(jnp.exp(x - m), axis=-1, keepdims=True)) + m
            tgt_logit = jnp.sum(jnp.where(onehot, x, 0.0), axis=-1, keepdims=True)
            loss = lse - tgt_logit                          # (tn, 1)
            if valid is not None:
                loss = jnp.where(valid, loss, 0.0)          # zero padded rows
            return loss

        loss_out = ce_rows(out_lg_ref, onehot_out)
        loss_emb = ce_rows(emb_lg_ref, onehot_emb)
        if mu_f == 1.0:
            ce_acc[...] += loss_out + loss_emb              # vreg-shaped VALU adds
        else:
            ce_acc[...] += loss_out + mu_f * loss_emb

        # ---- gate column abs-sums (additive across row tiles) ---------------
        for g_ref, ga in zip(gate_refs, gate_accs):
            g = jnp.abs(g_ref[...].astype(jnp.float32))     # (tn, G)
            if valid is not None:
                g = jnp.where(valid, g, 0.0)
            gdim = g.shape[1]
            if gate_vreg_accum:
                # (tn,G)->(tn//8,8,G): sum over leading axis = elementwise vreg adds.
                ga[...] += jnp.sum(g.reshape(tn // 8, 8, gdim), axis=0)
            else:
                ga[...] += jnp.sum(g, axis=0, keepdims=True)

        # ---- finalize: one cross-lane/sublane reduction per split -----------
        @pl.when(j == n_j - 1)
        def _finalize():
            ce_out_ref[...] = jnp.sum(ce_acc[...]).reshape(1, 1, 1)
            for go_ref, ga in zip(gate_out_refs, gate_accs):
                gdim = go_ref.shape[2]
                go_ref[...] = jnp.sum(ga[...], axis=0).reshape(1, 1, gdim)

    return kernel


# -----------------------------------------------------------------------------
# Wrapper: generation-aware tile selection + one fused pallas_call + tiny combine.
# -----------------------------------------------------------------------------
def deepmoe_loss(outputs, embedding_outputs, targets, gates,
                 lambda_val=0.001, mu=1.0, tile_n=None, num_split=None):
    outputs = jnp.asarray(outputs)
    embedding_outputs = jnp.asarray(embedding_outputs)
    gates = [jnp.asarray(g) for g in gates]
    targets = jnp.asarray(targets)

    n, c_out = outputs.shape
    c_emb = int(embedding_outputs.shape[1])
    gate_dims = [int(g.shape[1]) for g in gates]

    # ---- generation-aware VMEM budgeting (v5e/v6e: 128 MiB, v7x: 64 MiB/TC) ----
    try:
        vmem_cap = int(pltpu.get_tpu_info().vmem_capacity_bytes)
    except Exception:
        vmem_cap = 64 * 1024 * 1024              # conservative (v7x-safe) fallback

    row_bytes = (c_out * outputs.dtype.itemsize
                 + c_emb * embedding_outputs.dtype.itemsize
                 + sum(gd * g.dtype.itemsize for gd, g in zip(gate_dims, gates))
                 + 4)                            # int32 target

    block_budget = min((3 * vmem_cap) // 8, 48 * 1024 * 1024)  # ~24 MiB v7x / 48 MiB v5e-v6e
    vmem_limit = min((7 * vmem_cap) // 8, 112 * 1024 * 1024)   # <=56 MiB on v7x

    if tile_n is None:
        t = block_budget // max(1, 2 * row_bytes)   # x2: double-buffered blocks
        t = max(8, (t // 8) * 8)
        tile_n = min(t, 8192)
        # Prefer a tile that divides N (compiles the masked path away entirely).
        if tile_n < n and n % tile_n != 0:
            for cand in range(tile_n, max(8, tile_n // 2) - 1, -8):
                if n % cand == 0:
                    tile_n = cand
                    break
    tile_n = int(min(tile_n, n))                    # full-dim block allowed

    num_blocks = _cdiv(n, tile_n)

    if num_split is None:
        # Multi-TensorCore proxy (v7x has 64 MiB VMEM per TC): shard the batch
        # reduction across cores via the leading "parallel" grid axis.
        num_split = 2 if (vmem_cap <= 96 * 1024 * 1024 and num_blocks >= 4) else 1
    num_split = max(1, min(int(num_split), num_blocks))

    tiles_per_split = _cdiv(num_blocks, num_split)
    padded_blocks = tiles_per_split * num_split
    need_mask = (padded_blocks != num_blocks) or (n % tile_n != 0)
    gate_vreg_accum = (tile_n % 8 == 0)

    last_block = num_blocks - 1
    if padded_blocks != num_blocks:
        def row_block(s, j):
            # Clamp duplicated trailing blocks; the kernel masks them to zero.
            return jnp.minimum(s * tiles_per_split + j, last_block)
    else:
        def row_block(s, j):
            return s * tiles_per_split + j

    targets2d = targets.astype(jnp.int32).reshape(n, 1)   # tiny; cheap to prep

    in_specs = [
        pl.BlockSpec((tile_n, 1), lambda s, j: (row_block(s, j), 0)),       # targets
        pl.BlockSpec((tile_n, c_out), lambda s, j: (row_block(s, j), 0)),   # outputs
        pl.BlockSpec((tile_n, c_emb), lambda s, j: (row_block(s, j), 0)),   # embedding_outputs
    ]
    for gd in gate_dims:
        # TODO(synk): present G<128 gates lane-dense ((N,G)->(N*G/128,128)) to fill
        # vregs; skipped here to keep the masked/split paths simple (gates are a small
        # fraction of HBM traffic relative to the logit matrices).
        in_specs.append(pl.BlockSpec((tile_n, gd), lambda s, j: (row_block(s, j), 0)))

    # Per-split partial outputs (combined with a trivial JAX epilogue).
    out_shape = [jax.ShapeDtypeStruct((num_split, 1, 1), jnp.float32)]
    out_specs = [pl.BlockSpec((1, 1, 1), lambda s, j: (s, 0, 0))]
    for gd in gate_dims:
        out_shape.append(jax.ShapeDtypeStruct((num_split, 1, gd), jnp.float32))
        out_specs.append(pl.BlockSpec((1, 1, gd), lambda s, j: (s, 0, 0)))

    gate_acc_rows = 8 if gate_vreg_accum else 1
    scratch_shapes = ([pltpu.VMEM((tile_n, 1), jnp.float32)]                 # per-row CE sums
                      + [pltpu.VMEM((gate_acc_rows, gd), jnp.float32) for gd in gate_dims])

    # Advisory cost estimate (helps XLA schedule the loss against neighbors).
    bytes_accessed = int(n * 4
                         + outputs.size * outputs.dtype.itemsize
                         + embedding_outputs.size * embedding_outputs.dtype.itemsize
                         + sum(g.size * g.dtype.itemsize for g in gates)
                         + 4 * num_split * (1 + sum(gate_dims)))
    flops = int(6 * (outputs.size + embedding_outputs.size)
                + 2 * sum(g.size for g in gates))
    transcendentals = int(outputs.size + embedding_outputs.size + 2 * n)

    kernel = _make_fused_kernel(len(gates), n, tile_n, tiles_per_split, mu,
                                need_mask, gate_vreg_accum)

    results = pl.pallas_call(
        kernel,
        out_shape=tuple(out_shape),
        grid_spec=pltpu.PrefetchScalarGridSpec(
            num_scalar_prefetch=0,
            grid=(num_split, tiles_per_split),
            in_specs=in_specs,
            out_specs=tuple(out_specs),
            scratch_shapes=scratch_shapes,
        ),
        compiler_params=pltpu.CompilerParams(
            dimension_semantics=("parallel", "arbitrary"),   # split across TCs, reduce over tiles
            vmem_limit_bytes=int(vmem_limit),
        ),
        cost_estimate=pl.CostEstimate(flops=flops,
                                      transcendentals=transcendentals,
                                      bytes_accessed=bytes_accessed),
    )(targets2d, outputs, embedding_outputs, *gates)

    ce_partials = results[0]                 # (num_split, 1, 1): sum(base + mu*emb) losses
    gate_partials = results[1:]              # each (num_split, 1, G): column abs-sums

    total = jnp.sum(ce_partials) / jnp.float32(n)
    gate_loss = jnp.float32(0.0)
    for gp in gate_partials:
        col_sums = jnp.sum(gp, axis=0)       # combine splits -> (1, G)
        gate_loss = gate_loss + jnp.max(col_sums)   # induced matrix 1-norm
    return total + jnp.float32(lambda_val) * gate_loss


# -----------------------------------------------------------------------------
# Demo + correctness check against a pure-JAX reference.
# -----------------------------------------------------------------------------
def _ce_ref(x, t):
    x = x.astype(jnp.float32)
    lse = jax.scipy.special.logsumexp(x, axis=-1)
    return jnp.mean(lse - x[jnp.arange(x.shape[0]), t])


def _ref_loss(outputs, emb, targets, gates, lam, mu):
    gate = sum(jnp.max(jnp.sum(jnp.abs(g.astype(jnp.float32)), axis=0)) for g in gates)
    return _ce_ref(outputs, targets) + lam * gate + mu * _ce_ref(emb, targets)


if __name__ == "__main__":
    root = jax.random.PRNGKey(0)

    # --- test 1: small single-tile case, auto heuristics ---------------------
    k1, k2, k3, k4, k5, k6 = jax.random.split(root, 6)
    N, C = 8, 32
    outputs = jax.random.normal(k1, (N, C), dtype=jnp.float32)
    embedding_outputs = jax.random.normal(k2, (N, C), dtype=jnp.float32)
    targets = jax.random.randint(k3, (N,), 0, C, dtype=jnp.int32)
    gates = [
        jax.random.uniform(k4, (N, 16), dtype=jnp.float32),
        jax.random.uniform(k5, (N, 32), dtype=jnp.float32),
        jax.random.uniform(k6, (N, 64), dtype=jnp.float32),
    ]
    total = deepmoe_loss(outputs, embedding_outputs, targets, gates,
                         lambda_val=0.001, mu=1.0)
    total = jax.block_until_ready(total)
    ref = _ref_loss(outputs, embedding_outputs, targets, gates, 0.001, 1.0)
    assert jnp.allclose(total, ref, rtol=1e-5, atol=1e-5), (total, ref)

    # --- test 2: ragged batch, forced 2-way split (clamped block + row mask),
    #             mixed dtypes, different class counts for the two CEs ---------
    kk = jax.random.fold_in(root, 1)
    k1, k2, k3, k4, k5 = jax.random.split(kk, 5)
    N2, C2a, C2b = 40, 32, 64
    outputs2 = jax.random.normal(k1, (N2, C2a), dtype=jnp.float32).astype(jnp.bfloat16)
    embedding_outputs2 = jax.random.normal(k2, (N2, C2b), dtype=jnp.float32)
    targets2 = jax.random.randint(k3, (N2,), 0, C2a, dtype=jnp.int32)
    gates2 = [
        jax.random.uniform(k4, (N2, 16), dtype=jnp.float32),
        jax.random.uniform(k5, (N2, 128), dtype=jnp.float32).astype(jnp.bfloat16),
    ]
    total2 = deepmoe_loss(outputs2, embedding_outputs2, targets2, gates2,
                          lambda_val=0.01, mu=0.5, tile_n=16, num_split=2)
    total2 = jax.block_until_ready(total2)
    ref2 = _ref_loss(outputs2, embedding_outputs2, targets2, gates2, 0.01, 0.5)
    assert jnp.allclose(total2, ref2, rtol=1e-4, atol=1e-4), (total2, ref2)

    print("KERNEL_OK")
</pallas_src>

<mosaic_0001>
module attributes {stable_mosaic.version = 11 : i64} {
  func.func @kernel(%arg0: i32, %arg1: i32, %arg2: memref<8x1xi32, #tpu.memory_space<vmem>>, %arg3: memref<8x32xf32, #tpu.memory_space<vmem>>, %arg4: memref<8x32xf32, #tpu.memory_space<vmem>>, %arg5: memref<8x16xf32, #tpu.memory_space<vmem>>, %arg6: memref<8x32xf32, #tpu.memory_space<vmem>>, %arg7: memref<8x64xf32, #tpu.memory_space<vmem>>, %arg8: memref<1x1x1xf32, #tpu.memory_space<vmem>>, %arg9: memref<1x1x16xf32, #tpu.memory_space<vmem>>, %arg10: memref<1x1x32xf32, #tpu.memory_space<vmem>>, %arg11: memref<1x1x64xf32, #tpu.memory_space<vmem>>, %arg12: memref<8x1xf32, #tpu.memory_space<vmem>>, %arg13: memref<8x16xf32, #tpu.memory_space<vmem>>, %arg14: memref<8x32xf32, #tpu.memory_space<vmem>>, %arg15: memref<8x64xf32, #tpu.memory_space<vmem>>) attributes {dimension_semantics = [#tpu.dimension_semantics<parallel>, #tpu.dimension_semantics<arbitrary>], iteration_bounds = array<i64: 1, 1>, scalar_prefetch = 0 : i64, scratch_operands = 4 : i64, tpu.core_type = #tpu.core_type<tc>, window_params = [{transform_indices = @transform_0, window_bounds = array<i64: 8, 1>}, {transform_indices = @transform_1, window_bounds = array<i64: 8, 32>}, {transform_indices = @transform_2, window_bounds = array<i64: 8, 32>}, {transform_indices = @transform_3, window_bounds = array<i64: 8, 16>}, {transform_indices = @transform_4, window_bounds = array<i64: 8, 32>}, {transform_indices = @transform_5, window_bounds = array<i64: 8, 64>}, {transform_indices = @transform_6, window_bounds = array<i64: 1, 1, 1>}, {transform_indices = @transform_7, window_bounds = array<i64: 1, 1, 16>}, {transform_indices = @transform_8, window_bounds = array<i64: 1, 1, 32>}, {transform_indices = @transform_9, window_bounds = array<i64: 1, 1, 64>}]} {
    %c0_i32 = arith.constant 0 : i32
    %0 = arith.cmpi eq, %arg1, %c0_i32 : i32
    %1 = arith.extui %0 : i1 to i32
    %c0_i32_0 = arith.constant 0 : i32
    %2 = arith.cmpi ne, %1, %c0_i32_0 : i32
    scf.if %2 {
      %cst_40 = arith.constant 0.000000e+00 : f32
      %65 = vector.broadcast %cst_40 : f32 to vector<8x1xf32>
      %c0_41 = arith.constant 0 : index
      %c0_42 = arith.constant 0 : index
      %66 = vector.load %arg12[%c0_41, %c0_42] : memref<8x1xf32, #tpu.memory_space<vmem>>, vector<8x1xf32>
      tpu.vector_store %arg12[%c0_41, %c0_42], %65 {strides = array<i32>} : memref<8x1xf32, #tpu.memory_space<vmem>>, vector<8x1xf32>,
      %cst_43 = arith.constant 0.000000e+00 : f32
      %67 = vector.broadcast %cst_43 : f32 to vector<8x16xf32>
      %c0_44 = arith.constant 0 : index
      %c0_45 = arith.constant 0 : index
      %68 = vector.load %arg13[%c0_44, %c0_45] : memref<8x16xf32, #tpu.memory_space<vmem>>, vector<8x16xf32>
      tpu.vector_store %arg13[%c0_44, %c0_45], %67 {strides = array<i32>} : memref<8x16xf32, #tpu.memory_space<vmem>>, vector<8x16xf32>,
      %cst_46 = arith.constant 0.000000e+00 : f32
      %69 = vector.broadcast %cst_46 : f32 to vector<8x32xf32>
      %c0_47 = arith.constant 0 : index
      %c0_48 = arith.constant 0 : index
      %70 = vector.load %arg14[%c0_47, %c0_48] : memref<8x32xf32, #tpu.memory_space<vmem>>, vector<8x32xf32>
      tpu.vector_store %arg14[%c0_47, %c0_48], %69 {strides = array<i32>} : memref<8x32xf32, #tpu.memory_space<vmem>>, vector<8x32xf32>,
      %cst_49 = arith.constant 0.000000e+00 : f32
      %71 = vector.broadcast %cst_49 : f32 to vector<8x64xf32>
      %c0_50 = arith.constant 0 : index
      %c0_51 = arith.constant 0 : index
      %72 = vector.load %arg15[%c0_50, %c0_51] : memref<8x64xf32, #tpu.memory_space<vmem>>, vector<8x64xf32>
      tpu.vector_store %arg15[%c0_50, %c0_51], %71 {strides = array<i32>} : memref<8x64xf32, #tpu.memory_space<vmem>>, vector<8x64xf32>,
    } else {
    }
    %c0 = arith.constant 0 : index
    %c0_1 = arith.constant 0 : index
    %3 = vector.load %arg2[%c0, %c0_1] : memref<8x1xi32, #tpu.memory_space<vmem>>, vector<8x1xi32>
    %4 = tpu.iota {dimensions = array<i32: 1>} : vector<8x32xi32>
    %5 = vector.broadcast %3 : vector<8x1xi32> to vector<8x32xi32>
    %6 = arith.cmpi eq, %4, %5 : vector<8x32xi32>
    %c0_2 = arith.constant 0 : index
    %c0_3 = arith.constant 0 : index
    %7 = vector.load %arg3[%c0_2, %c0_3] : memref<8x32xf32, #tpu.memory_space<vmem>>, vector<8x32xf32>
    %cst = arith.constant dense<0xFF800000> : vector<8xf32>
    %8 = vector.multi_reduction <maximumf>, %7, %cst [1] : vector<8x32xf32> to vector<8xf32>
    %9 = vector.shape_cast %8 : vector<8xf32> to vector<8x1xf32>
    %10 = vector.broadcast %9 : vector<8x1xf32> to vector<8x32xf32>
    %11 = arith.subf %7, %10 : vector<8x32xf32>
    %12 = math.exp %11 : vector<8x32xf32>
    %cst_4 = arith.constant dense<0.000000e+00> : vector<8xf32>
    %13 = vector.multi_reduction <add>, %12, %cst_4 [1] : vector<8x32xf32> to vector<8xf32>
    %14 = vector.shape_cast %13 : vector<8xf32> to vector<8x1xf32>
    %15 = math.log %14 : vector<8x1xf32>
    %16 = arith.addf %15, %9 : vector<8x1xf32>
    %cst_5 = arith.constant 0.000000e+00 : f32
    %17 = vector.broadcast %cst_5 : f32 to vector<8x32xf32>
    %18 = arith.select %6, %7, %17 : vector<8x32xi1>, vector<8x32xf32>
    %cst_6 = arith.constant dense<0.000000e+00> : vector<8xf32>
    %19 = vector.multi_reduction <add>, %18, %cst_6 [1] : vector<8x32xf32> to vector<8xf32>
    %20 = vector.shape_cast %19 : vector<8xf32> to vector<8x1xf32>
    %21 = arith.subf %16, %20 : vector<8x1xf32>
    %c0_7 = arith.constant 0 : index
    %c0_8 = arith.constant 0 : index
    %22 = vector.load %arg4[%c0_7, %c0_8] : memref<8x32xf32, #tpu.memory_space<vmem>>, vector<8x32xf32>
    %cst_9 = arith.constant dense<0xFF800000> : vector<8xf32>
    %23 = vector.multi_reduction <maximumf>, %22, %cst_9 [1] : vector<8x32xf32> to vector<8xf32>
    %24 = vector.shape_cast %23 : vector<8xf32> to vector<8x1xf32>
    %25 = vector.broadcast %24 : vector<8x1xf32> to vector<8x32xf32>
    %26 = arith.subf %22, %25 : vector<8x32xf32>
    %27 = math.exp %26 : vector<8x32xf32>
    %cst_10 = arith.constant dense<0.000000e+00> : vector<8xf32>
    %28 = vector.multi_reduction <add>, %27, %cst_10 [1] : vector<8x32xf32> to vector<8xf32>
    %29 = vector.shape_cast %28 : vector<8xf32> to vector<8x1xf32>
    %30 = math.log %29 : vector<8x1xf32>
    %31 = arith.addf %30, %24 : vector<8x1xf32>
    %cst_11 = arith.constant 0.000000e+00 : f32
    %32 = vector.broadcast %cst_11 : f32 to vector<8x32xf32>
    %33 = arith.select %6, %22, %32 : vector<8x32xi1>, vector<8x32xf32>
    %cst_12 = arith.constant dense<0.000000e+00> : vector<8xf32>
    %34 = vector.multi_reduction <add>, %33, %cst_12 [1] : vector<8x32xf32> to vector<8xf32>
    %35 = vector.shape_cast %34 : vector<8xf32> to vector<8x1xf32>
    %36 = arith.subf %31, %35 : vector<8x1xf32>
    %c0_13 = arith.constant 0 : index
    %c0_14 = arith.constant 0 : index
    %37 = vector.load %arg12[%c0_13, %c0_14] : memref<8x1xf32, #tpu.memory_space<vmem>>, vector<8x1xf32>
    %38 = arith.addf %21, %36 : vector<8x1xf32>
    %39 = arith.addf %37, %38 : vector<8x1xf32>
    %c0_15 = arith.constant 0 : index
    %c0_16 = arith.constant 0 : index
    %40 = vector.load %arg12[%c0_15, %c0_16] : memref<8x1xf32, #tpu.memory_space<vmem>>, vector<8x1xf32>
    tpu.vector_store %arg12[%c0_15, %c0_16], %39 {strides = array<i32>} : memref<8x1xf32, #tpu.memory_space<vmem>>, vector<8x1xf32>,
    %c0_17 = arith.constant 0 : index
    %c0_18 = arith.constant 0 : index
    %41 = vector.load %arg5[%c0_17, %c0_18] : memref<8x16xf32, #tpu.memory_space<vmem>>, vector<8x16xf32>
    %42 = math.absf %41 : vector<8x16xf32>
    %c0_19 = arith.constant 0 : index
    %c0_20 = arith.constant 0 : index
    %43 = vector.load %arg13[%c0_19, %c0_20] : memref<8x16xf32, #tpu.memory_space<vmem>>, vector<8x16xf32>
    %44 = vector.shape_cast %42 : vector<8x16xf32> to vector<1x8x16xf32>
    %cst_21 = arith.constant dense<0.000000e+00> : vector<8x16xf32>
    %45 = vector.multi_reduction <add>, %44, %cst_21 [0] : vector<1x8x16xf32> to vector<8x16xf32>
    %46 = arith.addf %43, %45 : vector<8x16xf32>
    %c0_22 = arith.constant 0 : index
    %c0_23 = arith.constant 0 : index
    %47 = vector.load %arg13[%c0_22, %c0_23] : memref<8x16xf32, #tpu.memory_space<vmem>>, vector<8x16xf32>
    tpu.vector_store %arg13[%c0_22, %c0_23], %46 {strides = array<i32>} : memref<8x16xf32, #tpu.memory_space<vmem>>, vector<8x16xf32>,
    %c0_24 = arith.constant 0 : index
    %c0_25 = arith.constant 0 : index
    %48 = vector.load %arg6[%c0_24, %c0_25] : memref<8x32xf32, #tpu.memory_space<vmem>>, vector<8x32xf32>
    %49 = math.absf %48 : vector<8x32xf32>
    %c0_26 = arith.constant 0 : index
    %c0_27 = arith.constant 0 : index
    %50 = vector.load %arg14[%c0_26, %c0_27] : memref<8x32xf32, #tpu.memory_space<vmem>>, vector<8x32xf32>
    %51 = vector.shape_cast %49 : vector<8x32xf32> to vector<1x8x32xf32>
    %cst_28 = arith.constant dense<0.000000e+00> : vector<8x32xf32>
    %52 = vector.multi_reduction <add>, %51, %cst_28 [0] : vector<1x8x32xf32> to vector<8x32xf32>
    %53 = arith.addf %50, %52 : vector<8x32xf32>
    %c0_29 = arith.constant 0 : index
    %c0_30 = arith.constant 0 : index
    %54 = vector.load %arg14[%c0_29, %c0_30] : memref<8x32xf32, #tpu.memory_space<vmem>>, vector<8x32xf32>
    tpu.vector_store %arg14[%c0_29, %c0_30], %53 {strides = array<i32>} : memref<8x32xf32, #tpu.memory_space<vmem>>, vector<8x32xf32>,
    %c0_31 = arith.constant 0 : index
    %c0_32 = arith.constant 0 : index
    %55 = vector.load %arg7[%c0_31, %c0_32] : memref<8x64xf32, #tpu.memory_space<vmem>>, vector<8x64xf32>
    %56 = math.absf %55 : vector<8x64xf32>
    %c0_33 = arith.constant 0 : index
    %c0_34 = arith.constant 0 : index
    %57 = vector.load %arg15[%c0_33, %c0_34] : memref<8x64xf32, #tpu.memory_space<vmem>>, vector<8x64xf32>
    %58 = vector.shape_cast %56 : vector<8x64xf32> to vector<1x8x64xf32>
    %cst_35 = arith.constant dense<0.000000e+00> : vector<8x64xf32>
    %59 = vector.multi_reduction <add>, %58, %cst_35 [0] : vector<1x8x64xf32> to vector<8x64xf32>
    %60 = arith.addf %57, %59 : vector<8x64xf32>
    %c0_36 = arith.constant 0 : index
    %c0_37 = arith.constant 0 : index
    %61 = vector.load %arg15[%c0_36, %c0_37] : memref<8x64xf32, #tpu.memory_space<vmem>>, vector<8x64xf32>
    tpu.vector_store %arg15[%c0_36, %c0_37], %60 {strides = array<i32>} : memref<8x64xf32, #tpu.memory_space<vmem>>, vector<8x64xf32>,
    %c0_i32_38 = arith.constant 0 : i32
    %62 = arith.cmpi eq, %arg1, %c0_i32_38 : i32
    %63 = arith.extui %62 : i1 to i32
    %c0_i32_39 = arith.constant 0 : i32
    %64 = arith.cmpi ne, %63, %c0_i32_39 : i32
    scf.if %64 {
      %c0_40 = arith.constant 0 : index
      %c0_41 = arith.constant 0 : index
      %65 = vector.load %arg12[%c0_40, %c0_41] : memref<8x1xf32, #tpu.memory_space<vmem>>, vector<8x1xf32>
      %66 = vector.shape_cast %65 : vector<8x1xf32> to vector<1x8x1xf32>
      %cst_42 = arith.constant dense<0.000000e+00> : vector<1xf32>
      %67 = vector.multi_reduction <add>, %66, %cst_42 [1, 2] : vector<1x8x1xf32> to vector<1xf32>
      %68 = vector.shape_cast %67 : vector<1xf32> to vector<1x1x1xf32>
      %69 = vector.extract %68[0, 0, 0] : f32 from vector<1x1x1xf32>
      %70 = vector.broadcast %69 : f32 to vector<1x1x1xf32>
      %c0_43 = arith.constant 0 : index
      %c0_44 = arith.constant 0 : index
      %c0_45 = arith.constant 0 : index
      %71 = vector.load %arg8[%c0_43, %c0_44, %c0_45] : memref<1x1x1xf32, #tpu.memory_space<vmem>>, vector<1x1x1xf32>
      tpu.vector_store %arg8[%c0_43, %c0_44, %c0_45], %70 {strides = array<i32>} : memref<1x1x1xf32, #tpu.memory_space<vmem>>, vector<1x1x1xf32>,
      %c0_46 = arith.constant 0 : index
      %c0_47 = arith.constant 0 : index
      %72 = vector.load %arg13[%c0_46, %c0_47] : memref<8x16xf32, #tpu.memory_space<vmem>>, vector<8x16xf32>
      %cst_48 = arith.constant dense<0.000000e+00> : vector<16xf32>
      %73 = vector.multi_reduction <add>, %72, %cst_48 [0] : vector<8x16xf32> to vector<16xf32>
      %74 = vector.shape_cast %73 : vector<16xf32> to vector<1x1x16xf32>
      %c0_49 = arith.constant 0 : index
      %c0_50 = arith.constant 0 : index
      %c0_51 = arith.constant 0 : index
      %75 = vector.load %arg9[%c0_49, %c0_50, %c0_51] : memref<1x1x16xf32, #tpu.memory_space<vmem>>, vector<1x1x16xf32>
      tpu.vector_store %arg9[%c0_49, %c0_50, %c0_51], %74 {strides = array<i32>} : memref<1x1x16xf32, #tpu.memory_space<vmem>>, vector<1x1x16xf32>,
      %c0_52 = arith.constant 0 : index
      %c0_53 = arith.constant 0 : index
      %76 = vector.load %arg14[%c0_52, %c0_53] : memref<8x32xf32, #tpu.memory_space<vmem>>, vector<8x32xf32>
      %cst_54 = arith.constant dense<0.000000e+00> : vector<32xf32>
      %77 = vector.multi_reduction <add>, %76, %cst_54 [0] : vector<8x32xf32> to vector<32xf32>
      %78 = vector.shape_cast %77 : vector<32xf32> to vector<1x1x32xf32>
      %c0_55 = arith.constant 0 : index
      %c0_56 = arith.constant 0 : index
      %c0_57 = arith.constant 0 : index
      %79 = vector.load %arg10[%c0_55, %c0_56, %c0_57] : memref<1x1x32xf32, #tpu.memory_space<vmem>>, vector<1x1x32xf32>
      tpu.vector_store %arg10[%c0_55, %c0_56, %c0_57], %78 {strides = array<i32>} : memref<1x1x32xf32, #tpu.memory_space<vmem>>, vector<1x1x32xf32>,
      %c0_58 = arith.constant 0 : index
      %c0_59 = arith.constant 0 : index
      %80 = vector.load %arg15[%c0_58, %c0_59] : memref<8x64xf32, #tpu.memory_space<vmem>>, vector<8x64xf32>
      %cst_60 = arith.constant dense<0.000000e+00> : vector<64xf32>
      %81 = vector.multi_reduction <add>, %80, %cst_60 [0] : vector<8x64xf32> to vector<64xf32>
      %82 = vector.shape_cast %81 : vector<64xf32> to vector<1x1x64xf32>
      %c0_61 = arith.constant 0 : index
      %c0_62 = arith.constant 0 : index
      %c0_63 = arith.constant 0 : index
      %83 = vector.load %arg11[%c0_61, %c0_62, %c0_63] : memref<1x1x64xf32, #tpu.memory_space<vmem>>, vector<1x1x64xf32>
      tpu.vector_store %arg11[%c0_61, %c0_62, %c0_63], %82 {strides = array<i32>} : memref<1x1x64xf32, #tpu.memory_space<vmem>>, vector<1x1x64xf32>,
    } else {
    }
    return
  }
  func.func @transform_0(%arg0: i32, %arg1: i32) -> (i32, i32) {
    %c1_i32 = arith.constant 1 : i32
    %0 = arith.muli %arg0, %c1_i32 : i32
    %1 = arith.addi %0, %arg1 : i32
    %c0_i32 = arith.constant 0 : i32
    %c0_i32_0 = arith.constant 0 : i32
    return %1, %c0_i32 : i32, i32
  }
  func.func @transform_1(%arg0: i32, %arg1: i32) -> (i32, i32) {
    %c1_i32 = arith.constant 1 : i32
    %0 = arith.muli %arg0, %c1_i32 : i32
    %1 = arith.addi %0, %arg1 : i32
    %c0_i32 = arith.constant 0 : i32
    %c0_i32_0 = arith.constant 0 : i32
    return %1, %c0_i32 : i32, i32
  }
  func.func @transform_2(%arg0: i32, %arg1: i32) -> (i32, i32) {
    %c1_i32 = arith.constant 1 : i32
    %0 = arith.muli %arg0, %c1_i32 : i32
    %1 = arith.addi %0, %arg1 : i32
    %c0_i32 = arith.constant 0 : i32
    %c0_i32_0 = arith.constant 0 : i32
    return %1, %c0_i32 : i32, i32
  }
  func.func @transform_3(%arg0: i32, %arg1: i32) -> (i32, i32) {
    %c1_i32 = arith.constant 1 : i32
    %0 = arith.muli %arg0, %c1_i32 : i32
    %1 = arith.addi %0, %arg1 : i32
    %c0_i32 = arith.constant 0 : i32
    %c0_i32_0 = arith.constant 0 : i32
    return %1, %c0_i32 : i32, i32
  }
  func.func @transform_4(%arg0: i32, %arg1: i32) -> (i32, i32) {
    %c1_i32 = arith.constant 1 : i32
    %0 = arith.muli %arg0, %c1_i32 : i32
    %1 = arith.addi %0, %arg1 : i32
    %c0_i32 = arith.constant 0 : i32
    %c0_i32_0 = arith.constant 0 : i32
    return %1, %c0_i32 : i32, i32
  }
  func.func @transform_5(%arg0: i32, %arg1: i32) -> (i32, i32) {
    %c1_i32 = arith.constant 1 : i32
    %0 = arith.muli %arg0, %c1_i32 : i32
    %1 = arith.addi %0, %arg1 : i32
    %c0_i32 = arith.constant 0 : i32
    %c0_i32_0 = arith.constant 0 : i32
    return %1, %c0_i32 : i32, i32
  }
  func.func @transform_6(%arg0: i32, %arg1: i32) -> (i32, i32, i32) {
    %c0_i32 = arith.constant 0 : i32
    %c0_i32_0 = arith.constant 0 : i32
    %c0_i32_1 = arith.constant 0 : i32
    return %arg0, %c0_i32, %c0_i32_0 : i32, i32, i32
  }
  func.func @transform_7(%arg0: i32, %arg1: i32) -> (i32, i32, i32) {
    %c0_i32 = arith.constant 0 : i32
    %c0_i32_0 = arith.constant 0 : i32
    %c0_i32_1 = arith.constant 0 : i32
    return %arg0, %c0_i32, %c0_i32_0 : i32, i32, i32
  }
  func.func @transform_8(%arg0: i32, %arg1: i32) -> (i32, i32, i32) {
    %c0_i32 = arith.constant 0 : i32
    %c0_i32_0 = arith.constant 0 : i32
    %c0_i32_1 = arith.constant 0 : i32
    return %arg0, %c0_i32, %c0_i32_0 : i32, i32, i32
  }
  func.func @transform_9(%arg0: i32, %arg1: i32) -> (i32, i32, i32) {
    %c0_i32 = arith.constant 0 : i32
    %c0_i32_0 = arith.constant 0 : i32
    %c0_i32_1 = arith.constant 0 : i32
    return %arg0, %c0_i32, %c0_i32_0 : i32, i32, i32
  }
}

</mosaic_0001>

<llo_original>
// kernel: tpu_custom_call.1
$region0: #{tpu_custom_call.1}
  #allocation0 [shape = 'u32[]', space=smem, size = 0x4, offset = 0x4, fixed_abs, tag = 'smem constant byte address 0x4 - core index']
  #allocation1 [shape = 'u32[72,128]{1,0:T(1,128)}', space=vmem, size = 0x9000, scoped, tag = 'internal scratch']
  #allocation2 [shape = 'f32[8,1]{1,0:T(8,128)}', space=vmem, size = 0x1000, scoped, tag = 'scratch operand']
  #allocation3 [shape = 'f32[8,16]{1,0:T(8,128)}', space=vmem, size = 0x1000, scoped, tag = 'scratch operand']
  #allocation4 [shape = 'f32[8,32]{1,0:T(8,128)}', space=vmem, size = 0x1000, scoped, tag = 'scratch operand']
  #allocation5 [shape = 'f32[8,64]{1,0:T(8,128)}', space=vmem, size = 0x1000, scoped, tag = 'scratch operand']
  %s0 = inlined_call_operand.vmem [shape: s32[8,1], index: 0, kind: input, shape index: {}]
  %s1 = inlined_call_operand.vmem [shape: f32[8,32], index: 1, kind: input, shape index: {}]
  %s2 = inlined_call_operand.hbm [shape: f32[8,32], index: 2, kind: input, shape index: {}]
  %s3 = inlined_call_operand.hbm [shape: f32[8,16], index: 3, kind: input, shape index: {}]
  %s4 = inlined_call_operand.hbm [shape: f32[8,32], index: 4, kind: input, shape index: {}]
  %s5 = inlined_call_operand.hbm [shape: f32[8,64], index: 5, kind: input, shape index: {}]
  %s6 = inlined_call_operand.hbm [shape: f32[1,1,1], index: 6, kind: output, shape index: {0}]
  %s7 = inlined_call_operand.hbm [shape: f32[1,1,16], index: 7, kind: output, shape index: {1}]
  %s8 = inlined_call_operand.hbm [shape: f32[1,1,32], index: 8, kind: output, shape index: {2}]
  %s9 = inlined_call_operand.hbm [shape: f32[1,1,64], index: 9, kind: output, shape index: {3}]
  %10 = xla_tuple %s6, %s7, %s8, %s9
  %s11 = sld [smem:[#allocation0]]
  $region82: #{tpu_custom_call.1} parent=0
    _
  %s13 = ssub.s32 1, %s11
  %s14 = scalar_select 0, %s13, %s11
  $region1: #{tpu_custom_call.1} parent=0
    #allocation6 [shape = 'u8[4096]{0}', space=vmem, size = 0x1000, scoped, tag = 'input window, operand 2, single buffered']
    #allocation7 [shape = 's32[1]{0}', space=sflag, size = 0x4, scoped, tag = 'scoped memory for tpu_custom_call.1']
    #allocation8 [shape = 's32[1]{0}', space=sflag, size = 0x4, scoped, tag = 'scoped memory for tpu_custom_call.1']
    #allocation9 [shape = 'u8[4096]{0}', space=vmem, size = 0x1000, scoped, tag = 'input window, operand 3, single buffered']
    #allocation10 [shape = 's32[1]{0}', space=sflag, size = 0x4, scoped, tag = 'scoped memory for tpu_custom_call.1']
    #allocation11 [shape = 'u8[4096]{0}', space=vmem, size = 0x1000, scoped, tag = 'input window, operand 4, single buffered']
    #allocation12 [shape = 'u8[4096]{0}', space=vmem, size = 0x1000, scoped, tag = 'input window, operand 5, single buffered']
    #allocation13 [shape = 's32[1]{0}', space=sflag, size = 0x4, scoped, tag = 'scoped memory for tpu_custom_call.1']
    #allocation14 [shape = 'u8[512]{0}', space=vmem, size = 0x400, scoped, tag = 'output window, operand 0, single buffered']
    #allocation15 [shape = 'u8[512]{0}', space=vmem, size = 0x400, scoped, tag = 'output window, operand 1, single buffered']
    #allocation16 [shape = 's32[1]{0}', space=sflag, size = 0x4, scoped, tag = 'scoped memory for tpu_custom_call.1']
    #allocation17 [shape = 'u8[512]{0}', space=vmem, size = 0x400, scoped, tag = 'output window, operand 2, single buffered']
    #allocation18 [shape = 'u8[512]{0}', space=vmem, size = 0x400, scoped, tag = 'output window, operand 3, single buffered']
    #allocation19 [shape = 's32[1]{0}', space=sflag, size = 0x4, scoped, tag = 'scoped memory for tpu_custom_call.1']
    %15 = vsyncpa [#allocation7], 0
    %16 = vsyncpa [#allocation10], 0
    %17 = vsyncpa [#allocation13], 0
    %18 = vsyncpa [#allocation8], 0
    %19 = vsyncpa [#allocation16], 0
    %20 = vsyncpa [#allocation19], 0
    // Predicated region
    $region2: #{tpu_custom_call.1} parent=1 // pred_check
      _
    $region3: #{tpu_custom_call.1} parent=1 // pred_check_branch
      %22 = sbr.rel (0) target = $region5
    $region4: #{tpu_custom_call.1} parent=1 // pred_region
      %s23 = sadd.s32 0, 0
      %p24 = scmp.lt.s32.totalorder %s23, 0
      %s25 = scalar_select %p24, %s23, 0
      %s26 = smul.addr %s25, 8
      %s27 = scalar_lea.vmem %s0, %s26
      %s28 = sadd.s32 0, 0
    $region5: #{tpu_custom_call.1} parent=1 // pred_fallthru
      _
    // Predicated region
    $region6: #{tpu_custom_call.1} parent=1 // pred_check
      _
    $region7: #{tpu_custom_call.1} parent=1 // pred_check_branch
      %30 = sbr.rel (0) target = $region9
    $region8: #{tpu_custom_call.1} parent=1 // pred_region
      %s31 = sadd.s32 0, 0
      %p32 = scmp.lt.s32.totalorder %s31, 0
      %s33 = scalar_select %p32, %s31, 0
      %s34 = smul.addr %s33, 8
      %s35 = scalar_lea.vmem %s1, %s34
      %s36 = sadd.s32 0, 0
    $region9: #{tpu_custom_call.1} parent=1 // pred_fallthru
      _
    // Predicated region
    $region10: #{tpu_custom_call.1} parent=1 // pred_check
      _
    $region11: #{tpu_custom_call.1} parent=1 // pred_check_branch
      %38 = sbr.rel (0) target = $region13
    $region12: #{tpu_custom_call.1} parent=1 // pred_region
      %s39 = sadd.s32 0, 0
      %41 = vsyncadd [#allocation7], 0
      %s42 = smul.addr %s39, 8
      %s43 = scalar_lea.hbm %s2, %s42
      %s45 = sshll.u32 %s43, 4
      %s46 = int_to_ptr.hbm [resolvable:$true] %s45
      %s47 = sshll.u32 [#allocation6], 4
      %s48 = int_to_ptr.vmem [resolvable:$true] %s47
      %50 = dma.hbm_to_vmem [thread:$0]  %s46, 128, %s48, [#allocation7]
    $region13: #{tpu_custom_call.1} parent=1 // pred_fallthru
      _
    // Predicated region
    $region14: #{tpu_custom_call.1} parent=1 // pred_check
      _
    $region15: #{tpu_custom_call.1} parent=1 // pred_check_branch
      %52 = sbr.rel (0) target = $region17
    $region16: #{tpu_custom_call.1} parent=1 // pred_region
      %s53 = sadd.s32 0, 0
      %55 = vsyncadd [#allocation10], 0
      %s56 = smul.addr %s53, 8
      %s57 = scalar_lea.hbm %s3, %s56
      %s59 = sshll.u32 %s57, 4
      %s60 = int_to_ptr.hbm [resolvable:$true] %s59
      %s61 = sshll.u32 [#allocation9], 4
      %s62 = int_to_ptr.vmem [resolvable:$true] %s61
      %64 = dma.hbm_to_vmem [thread:$0]  %s60, 128, %s62, [#allocation10]
    $region17: #{tpu_custom_call.1} parent=1 // pred_fallthru
      _
    // Predicated region
    $region18: #{tpu_custom_call.1} parent=1 // pred_check
      _
    $region19: #{tpu_custom_call.1} parent=1 // pred_check_branch
      %66 = sbr.rel (0) target = $region21
    $region20: #{tpu_custom_call.1} parent=1 // pred_region
      %s67 = sadd.s32 0, 0
      %69 = vsyncadd [#allocation10], 0
      %s70 = smul.addr %s67, 8
      %s71 = scalar_lea.hbm %s4, %s70
      %s73 = sshll.u32 %s71, 4
      %s74 = int_to_ptr.hbm [resolvable:$true] %s73
      %s75 = sshll.u32 [#allocation11], 4
      %s76 = int_to_ptr.vmem [resolvable:$true] %s75
      %78 = dma.hbm_to_vmem [thread:$0]  %s74, 128, %s76, [#allocation10]
    $region21: #{tpu_custom_call.1} parent=1 // pred_fallthru
      _
    // Predicated region
    $region22: #{tpu_custom_call.1} parent=1 // pred_check
      _
    $region23: #{tpu_custom_call.1} parent=1 // pred_check_branch
      %80 = sbr.rel (0) target = $region25
    $region24: #{tpu_custom_call.1} parent=1 // pred_region
      %s81 = sadd.s32 0, 0
      %83 = vsyncadd [#allocation13], 0
      %s84 = smul.addr %s81, 8
      %s85 = scalar_lea.hbm %s5, %s84
      %s87 = sshll.u32 %s85, 4
      %s88 = int_to_ptr.hbm [resolvable:$true] %s87
      %s89 = sshll.u32 [#allocation12], 4
      %s90 = int_to_ptr.vmem [resolvable:$true] %s89
      %92 = dma.hbm_to_vmem [thread:$0]  %s88, 128, %s90, [#allocation13]
    $region25: #{tpu_custom_call.1} parent=1 // pred_fallthru
      _
    // Predicated region
    $region26: #{tpu_custom_call.1} parent=1 // pred_check
      _
    $region27: #{tpu_custom_call.1} parent=1 // pred_check_branch
      %94 = sbr.rel (0) target = $region29
    $region28: #{tpu_custom_call.1} parent=1 // pred_region
      %96 = dma.done [#allocation7], 128
    $region29: #{tpu_custom_call.1} parent=1 // pred_fallthru
      _
    // Predicated region
    $region30: #{tpu_custom_call.1} parent=1 // pred_check
      _
    $region31: #{tpu_custom_call.1} parent=1 // pred_check_branch
      %98 = sbr.rel (0) target = $region33
    $region32: #{tpu_custom_call.1} parent=1 // pred_region
      %100 = dma.done [#allocation10], 128
    $region33: #{tpu_custom_call.1} parent=1 // pred_fallthru
      _
    // Predicated region
    $region34: #{tpu_custom_call.1} parent=1 // pred_check
      _
    $region35: #{tpu_custom_call.1} parent=1 // pred_check_branch
      %102 = sbr.rel (0) target = $region37
    $region36: #{tpu_custom_call.1} parent=1 // pred_region
      %104 = dma.done [#allocation10], 128
    $region37: #{tpu_custom_call.1} parent=1 // pred_fallthru
      _
    // Predicated region
    $region38: #{tpu_custom_call.1} parent=1 // pred_check
      _
    $region39: #{tpu_custom_call.1} parent=1 // pred_check_branch
      %106 = sbr.rel (0) target = $region41
    $region40: #{tpu_custom_call.1} parent=1 // pred_region
      %108 = dma.done [#allocation13], 128
    $region41: #{tpu_custom_call.1} parent=1 // pred_fallthru
      _
    %s109 = sadd.s32 0, 0
    %p110 = scmp.lt.s32.totalorder %s109, 0
    %s111 = scalar_select %p110, %s109, 0
    %s112 = smul.addr %s111, 8
    %s113 = scalar_lea.vmem %s0, %s112
    %s114 = sadd.s32 0, 0
    %p115 = scmp.lt.s32.totalorder %s114, 0
    %s116 = scalar_select %p115, %s114, 0
    %s117 = smul.addr %s116, 8
    %s118 = scalar_lea.vmem %s1, %s117
    %s119 = sadd.s32 0, 0
    %p120 = scmp.lt.s32.totalorder %s119, 0
    %s121 = scalar_select %p120, %s119, 0
    %s122 = smul.addr %s121, 8
    %s123 = scalar_lea.vmem %s0, %s122
    %s124 = sadd.s32 0, 0
    %s125 = sadd.s32 0, 0
    %p126 = scmp.lt.s32.totalorder %s125, 0
    %s127 = scalar_select %p126, %s125, 0
    %s128 = smul.addr %s127, 8
    %s129 = scalar_lea.vmem %s1, %s128
    %s130 = sadd.s32 0, 0
    %s131 = sadd.s32 0, 0
    %s132 = sadd.s32 0, 0
    %s133 = sadd.s32 0, 0
    %s134 = sadd.s32 0, 0
    %p135 = scmp.eq.s32.totalorder 0, 0
    // Predicated region
    $region42: #{tpu_custom_call.1} parent=1 // pred_check
      %p136 = pneg %p135
    $region43: #{tpu_custom_call.1} parent=1 // pred_check_branch
      %138 = sbr.rel (%p136) target = $region45
    $region44: #{tpu_custom_call.1} parent=1 // pred_region
      %vm139 = vcmask 7168
      %140 = vst.msk [vmem:[#allocation2] sm:$0xff] %vm139, 0.0
      %vm141 = vcmask 130048
      %142 = vst.msk [vmem:[#allocation3] sm:$0xff] %vm141, 0.0
      %vm143 = vcmask 261120
      %144 = vst.msk [vmem:[#allocation4] sm:$0xff] %vm143, 0.0
      %vm145 = vcmask 523264
      %146 = vst.msk [vmem:[#allocation5] sm:$0xff] %vm145, 0.0
    $region45: #{tpu_custom_call.1} parent=1 // pred_fallthru
      _
    %v147 = vld [vmem:[%s123] sm:$0xff]
    %v148 = vlaneseq
    %v149 = vand.u32 %v148, 127
    %150 = vset.pattern.permute.xlu0 0
    %151 = vperm.xlu0 %150, %v147
    %v152 = vpop.permute.xlu0 %151
    %vm153 = vcmp.eq.s32.totalorder %v149, %v152
    %v154 = vld [vmem:[%s129] sm:$0xff]
    %vm155 = vcmask 261120
    %v156 = vsel %vm155, %v154, -inf
    %157 = vmax.xlane.f32.xlu0 %v156
    %v158 = vpop.xlane.xlu0 %157
    %v159 = vsub.f32 %v154, %v158
    %v160 = vmul.f32 %v159, 1.442695
    %v161 = vpow.pop %v160
    %v162 = vsel %vm155, %v161, 0.0
    %163 = vadd.xlane.f32.xlu0 %v162
    %v164 = vpop.xlane.xlu0 %163
    %v165 = vlog2.pop %v164
    %v166 = vmul.f32 %v165, 0.6931472
    %v167 = vadd.f32 %v166, %v158
    %v168 = vsel %vm153, %v154, 0.0
    %v169 = vsel %vm155, %v168, 0.0
    %170 = vadd.xlane.f32.xlu0 %v169
    %v171 = vpop.xlane.xlu0 %170
    %v172 = vsub.f32 %v167, %v171
    %v173 = vld [vmem:[#allocation6] sm:$0xff]
    %v174 = vsel %vm155, %v173, -inf
    %175 = vmax.xlane.f32.xlu0 %v174
    %v176 = vpop.xlane.xlu0 %175
    %v177 = vsub.f32 %v173, %v176
    %v178 = vmul.f32 %v177, 1.442695
    %v179 = vpow.pop %v178
    %v180 = vsel %vm155, %v179, 0.0
    %181 = vadd.xlane.f32.xlu0 %v180
    %v182 = vpop.xlane.xlu0 %181
    %v183 = vlog2.pop %v182
    %v184 = vmul.f32 %v183, 0.6931472
    %v185 = vadd.f32 %v184, %v176
    %v186 = vsel %vm153, %v173, 0.0
    %v187 = vsel %vm155, %v186, 0.0
    %188 = vadd.xlane.f32.xlu0 %v187
    %v189 = vpop.xlane.xlu0 %188
    %v190 = vsub.f32 %v185, %v189
    %v191 = vld [vmem:[#allocation2] sm:$0xff]
    %v192 = vadd.f32 %v172, %v190
    %v193 = vadd.f32 %v191, %v192
    %vm194 = vcmask 7168
    %195 = vst.msk [vmem:[#allocation2] sm:$0xff] %vm194, %v193
    %v196 = vld [vmem:[#allocation9] sm:$0xff]
    %v197 = vand.u32 2147483647, %v196
    %v198 = vld [vmem:[#allocation3] sm:$0xff]
    %v199 = vadd.f32 %v197, 0.0
    %v200 = vadd.f32 %v198, %v199
    %vm201 = vcmask 130048
    %202 = vst.msk [vmem:[#allocation3] sm:$0xff] %vm201, %v200
    %v203 = vld [vmem:[#allocation11] sm:$0xff]
    %v204 = vand.u32 2147483647, %v203
    %v205 = vld [vmem:[#allocation4] sm:$0xff]
    %v206 = vadd.f32 %v204, 0.0
    %v207 = vadd.f32 %v205, %v206
    %208 = vst.msk [vmem:[#allocation4] sm:$0xff] %vm155, %v207
    %v209 = vld [vmem:[#allocation12] sm:$0xff]
    %v210 = vand.u32 2147483647, %v209
    %v211 = vld [vmem:[#allocation5] sm:$0xff]
    %v212 = vadd.f32 %v210, 0.0
    %v213 = vadd.f32 %v211, %v212
    %vm214 = vcmask 523264
    %215 = vst.msk [vmem:[#allocation5] sm:$0xff] %vm214, %v213
    // Predicated region
    $region46: #{tpu_custom_call.1} parent=1 // pred_check
      %p216 = pneg %p135
    $region47: #{tpu_custom_call.1} parent=1 // pred_check_branch
      %218 = sbr.rel (%p216) target = $region49
    $region48: #{tpu_custom_call.1} parent=1 // pred_region
      %v219 = vld [vmem:[#allocation2] sm:$0xff]
      %v220 = vsel %vm194, %v219, 0.0
      %221 = vadd.xlane.f32.xlu0 %v220
      %v222 = vpop.xlane.xlu0 %221
      %v223 = vrot.slane %v222, 4
      %v224 = vadd.f32 %v222, %v223
      %v225 = vrot.slane %v224, 2
      %v226 = vadd.f32 %v224, %v225
      %v227 = vrot.slane %v226, 1
      %v228 = vadd.f32 %v226, %v227
      %s229 = vtos %v228
      %v230 = vstv %s229
      %vm231 = vcmask 0
      %232 = vst.msk [vmem:[#allocation14] sm:$0x1] %vm231, %v230
      %v233 = vld [vmem:[#allocation3] sm:$0xff]
      %v234 = vsel %vm201, %v233, 0.0
      %v235 = vrot.slane %v234, 4
      %v236 = vadd.f32 %v234, %v235
      %v237 = vrot.slane %v236, 2
      %v238 = vadd.f32 %v236, %v237
      %v239 = vrot.slane %v238, 1
      %v240 = vadd.f32 %v238, %v239
      %vm241 = vcmask 122880
      %242 = vst.msk [vmem:[#allocation15] sm:$0x1] %vm241, %v240
      %v243 = vld [vmem:[#allocation4] sm:$0xff]
      %v244 = vsel %vm155, %v243, 0.0
      %v245 = vrot.slane %v244, 4
      %v246 = vadd.f32 %v244, %v245
      %v247 = vrot.slane %v246, 2
      %v248 = vadd.f32 %v246, %v247
      %v249 = vrot.slane %v248, 1
      %v250 = vadd.f32 %v248, %v249
      %vm251 = vcmask 253952
      %252 = vst.msk [vmem:[#allocation17] sm:$0x1] %vm251, %v250
      %v253 = vld [vmem:[#allocation5] sm:$0xff]
      %v254 = vsel %vm214, %v253, 0.0
      %v255 = vrot.slane %v254, 4
      %v256 = vadd.f32 %v254, %v255
      %v257 = vrot.slane %v256, 2
      %v258 = vadd.f32 %v256, %v257
      %v259 = vrot.slane %v258, 1
      %v260 = vadd.f32 %v258, %v259
      %vm261 = vcmask 516096
      %262 = vst.msk [vmem:[#allocation18] sm:$0x1] %vm261, %v260
    $region49: #{tpu_custom_call.1} parent=1 // pred_fallthru
      _
    // Predicated region
    $region50: #{tpu_custom_call.1} parent=1 // pred_check
      _
    $region51: #{tpu_custom_call.1} parent=1 // pred_check_branch
      %264 = sbr.rel (0) target = $region53
    $region52: #{tpu_custom_call.1} parent=1 // pred_region
      %266 = vsyncadd [#allocation8], 0
      %s268 = sshll.u32 [#allocation14], 4
      %s269 = int_to_ptr.vmem [resolvable:$true] %s268
      %s270 = sshll.u32 %s6, 4
      %s271 = int_to_ptr.hbm [resolvable:$true] %s270
      %273 = dma.vmem_to_hbm [thread:$0]  %s269, 16, %s271, [#allocation8]
    $region53: #{tpu_custom_call.1} parent=1 // pred_fallthru
      _
    // Predicated region
    $region54: #{tpu_custom_call.1} parent=1 // pred_check
      _
    $region55: #{tpu_custom_call.1} parent=1 // pred_check_branch
      %275 = sbr.rel (0) target = $region57
    $region56: #{tpu_custom_call.1} parent=1 // pred_region
      %277 = vsyncadd [#allocation16], 0
      %s279 = sshll.u32 [#allocation15], 4
      %s280 = int_to_ptr.vmem [resolvable:$true] %s279
      %s281 = sshll.u32 %s7, 4
      %s282 = int_to_ptr.hbm [resolvable:$true] %s281
      %284 = dma.vmem_to_hbm [thread:$0]  %s280, 16, %s282, [#allocation16]
    $region57: #{tpu_custom_call.1} parent=1 // pred_fallthru
      _
    // Predicated region
    $region58: #{tpu_custom_call.1} parent=1 // pred_check
      _
    $region59: #{tpu_custom_call.1} parent=1 // pred_check_branch
      %286 = sbr.rel (0) target = $region61
    $region60: #{tpu_custom_call.1} parent=1 // pred_region
      %288 = vsyncadd [#allocation16], 0
      %s290 = sshll.u32 [#allocation17], 4
      %s291 = int_to_ptr.vmem [resolvable:$true] %s290
      %s292 = sshll.u32 %s8, 4
      %s293 = int_to_ptr.hbm [resolvable:$true] %s292
      %295 = dma.vmem_to_hbm [thread:$0]  %s291, 16, %s293, [#allocation16]
    $region61: #{tpu_custom_call.1} parent=1 // pred_fallthru
      _
    // Predicated region
    $region62: #{tpu_custom_call.1} parent=1 // pred_check
      _
    $region63: #{tpu_custom_call.1} parent=1 // pred_check_branch
      %297 = sbr.rel (0) target = $region65
    $region64: #{tpu_custom_call.1} parent=1 // pred_region
      %299 = vsyncadd [#allocation19], 0
      %s301 = sshll.u32 [#allocation18], 4
      %s302 = int_to_ptr.vmem [resolvable:$true] %s301
      %s303 = sshll.u32 %s9, 4
      %s304 = int_to_ptr.hbm [resolvable:$true] %s303
      %306 = dma.vmem_to_hbm [thread:$0]  %s302, 16, %s304, [#allocation19]
    $region65: #{tpu_custom_call.1} parent=1 // pred_fallthru
      _
    // Predicated region
    $region66: #{tpu_custom_call.1} parent=1 // pred_check
      _
    $region67: #{tpu_custom_call.1} parent=1 // pred_check_branch
      %308 = sbr.rel (0) target = $region69
    $region68: #{tpu_custom_call.1} parent=1 // pred_region
      %310 = dma.done [#allocation8], 16
    $region69: #{tpu_custom_call.1} parent=1 // pred_fallthru
      _
    // Predicated region
    $region70: #{tpu_custom_call.1} parent=1 // pred_check
      _
    $region71: #{tpu_custom_call.1} parent=1 // pred_check_branch
      %312 = sbr.rel (0) target = $region73
    $region72: #{tpu_custom_call.1} parent=1 // pred_region
      %314 = dma.done [#allocation16], 16
    $region73: #{tpu_custom_call.1} parent=1 // pred_fallthru
      _
    // Predicated region
    $region74: #{tpu_custom_call.1} parent=1 // pred_check
      _
    $region75: #{tpu_custom_call.1} parent=1 // pred_check_branch
      %316 = sbr.rel (0) target = $region77
    $region76: #{tpu_custom_call.1} parent=1 // pred_region
      %318 = dma.done [#allocation16], 16
    $region77: #{tpu_custom_call.1} parent=1 // pred_fallthru
      _
    // Predicated region
    $region78: #{tpu_custom_call.1} parent=1 // pred_check
      _
    $region79: #{tpu_custom_call.1} parent=1 // pred_check_branch
      %320 = sbr.rel (0) target = $region81
    $region80: #{tpu_custom_call.1} parent=1 // pred_region
      %322 = dma.done [#allocation19], 16
    $region81: #{tpu_custom_call.1} parent=1 // pred_fallthru
      _
    %323 = vsyncpa [#allocation7], 1
    %324 = vsyncpa [#allocation10], 1
    %325 = vsyncpa [#allocation13], 1
    %326 = vsyncpa [#allocation8], 1
    %327 = vsyncpa [#allocation16], 1
    %328 = vsyncpa [#allocation19], 1

</llo_original>
